<compile_context>
chip_gen: v6e
topology: v6e:2x2x1
jax: 0.10.0
libtpu: 0.0.40
codegen_flags: <defaults>
</compile_context>

<pallas_src>
import jax
import jax.numpy as jnp
from jax.experimental import pallas as pl
from jax.experimental.pallas import tpu as pltpu


def _round_up(n, m):
    return ((n + m - 1) // m) * m


def mlp_kernel(x_ref, w1_ref, b1_ref, w2_ref, b2_ref, w3_ref, o_ref):
    # Layer 1: folded-BN Linear (bf16 MXU, f32 acc) -> bias add -> ReLU (f32).
    x = x_ref[...].astype(jnp.bfloat16)
    h = jnp.dot(x, w1_ref[...], preferred_element_type=jnp.float32)
    h = jnp.maximum(h + b1_ref[...], 0.0)
    # Hidden block (depth - 2 == 1): folded-BN Linear -> bias add -> ReLU.
    h = jnp.dot(h.astype(w2_ref.dtype), w2_ref[...],
                preferred_element_type=jnp.float32)
    h = jnp.maximum(h + b2_ref[...], 0.0)
    # Output layer: Linear (no bias).
    o_ref[...] = jnp.dot(h.astype(w3_ref.dtype), w3_ref[...],
                         preferred_element_type=jnp.float32)


def _build_and_run(x_p, w1_p, b1_p, w2_p, b2_p, w3_p, *, TM, Bp, input_dim, W,
                   C, vmem_limit, flops, bytes_accessed, single_buffer_weights):
    def resident(shape):
        # Same block every grid step -> stays VMEM-resident across the loop.
        if single_buffer_weights:
            return pl.BlockSpec(shape, lambda i: (0, 0),
                                pipeline_mode=pl.Buffered(1))
        return pl.BlockSpec(shape, lambda i: (0, 0))

    return pl.pallas_call(
        mlp_kernel,
        out_shape=jax.ShapeDtypeStruct((Bp, C), jnp.float32),
        grid_spec=pltpu.PrefetchScalarGridSpec(
            num_scalar_prefetch=0,
            grid=(Bp // TM,),
            in_specs=[
                # x: streamed per batch tile, full (unpadded) feature width.
                pl.BlockSpec((TM, input_dim), lambda i: (i, 0)),
                resident((input_dim, W)),   # w1 (BN scale folded)
                resident((1, W)),           # b1 (BN shift)
                resident((W, W)),           # w2 (BN scale folded)
                resident((1, W)),           # b2 (BN shift)
                resident((W, C)),           # w3
            ],
            out_specs=pl.BlockSpec((TM, C), lambda i: (i, 0)),
        ),
        compiler_params=pltpu.CompilerParams(
            dimension_semantics=("parallel",),
            vmem_limit_bytes=vmem_limit,
        ),
        cost_estimate=pl.CostEstimate(
            flops=flops, transcendentals=0, bytes_accessed=bytes_accessed),
    )(x_p, w1_p, b1_p, w2_p, b2_p, w3_p)


def fully_connected_forward(x, w1, s1, b1, w2, s2, b2, w3, *, tm_max=1024):
    """x: (B, input_dim) f32.  w*: (in, out) f32.  s*/b*: (1, width) f32."""
    B, input_dim = x.shape
    width = w1.shape[1]
    num_classes = w3.shape[1]

    # Fold the BatchNorm scale into the weight columns: (x @ w) * s == x @ (w*s).
    w1f = w1 * s1
    w2f = w2 * s2

    # Pad lane dims to multiples of 128 (zero padding is exact: padded hidden
    # columns get 0 pre-activation, 0 bias, ReLU(0)=0, and the corresponding
    # padded rows of the next weight are 0, so real outputs are unchanged).
    W = _round_up(width, 128)
    C = _round_up(num_classes, 128)

    def pad2(a, rows, cols):
        return jnp.pad(a, ((0, rows - a.shape[0]), (0, cols - a.shape[1])))

    w1_p = pad2(w1f, input_dim, W).astype(jnp.bfloat16)
    w2_p = pad2(w2f, W, W).astype(jnp.bfloat16)
    w3_p = pad2(w3, W, C).astype(jnp.bfloat16)
    b1_p = pad2(b1, 1, W).astype(jnp.float32)
    b2_p = pad2(b2, 1, W).astype(jnp.float32)

    # ---- VMEM-budget-aware batch-tile (TM) selection --------------------
    try:
        info = pltpu.get_tpu_info()
        phys_vmem = int(getattr(info, "vmem_capacity_bytes", 64 * 2**20))
    except Exception:
        phys_vmem = 64 * 2**20  # conservative (v7x) fallback
    budget = int(phys_vmem * 0.78)  # ~50 MiB on v7x, ~100 MiB on v5e/v6e

    weight_bytes = (input_dim * W + W * W + W * C) * 2 + 2 * W * 4
    per_row = (2 * input_dim * 4      # x f32, double-buffered
               + 2 * C * 4            # out f32, double-buffered
               + input_dim * 2        # in-kernel bf16 copy of x
               + 3 * W * 4            # f32 intermediates
               + 2 * W * 2)           # bf16 copies fed to the MXU
    avail = budget - weight_bytes - (2 << 20)   # misc compiler scratch
    tm_budget = max(16, avail // per_row)
    if tm_budget >= 256:
        tm_budget = (tm_budget // 256) * 256    # align to 256-wide MXU
    else:
        tm_budget = max(16, (tm_budget // 16) * 16)

    TM = int(min(tm_max, tm_budget, _round_up(B, 16)))
    TM = max(16, (TM // 16) * 16)               # multiple of 16 (bf16 packing)
    Bp = _round_up(B, TM)

    # Prefer >=2 grid steps so both v7x TensorCores get work (harmless on
    # v5e/v6e).  TODO(synk): also prefer an even step count for perfect
    # 2-core balance when B is large.
    if Bp // TM < 2:
        half = max(16, _round_up(TM // 2, 16))
        if _round_up(B, half) // half >= 2:
            TM = half
            Bp = _round_up(B, TM)

    x_p = x if Bp == B else jnp.pad(x, ((0, Bp - B), (0, 0)))
    x_p = x_p.astype(jnp.float32)

    flops = 2 * Bp * (input_dim * W + W * W + W * C)
    bytes_accessed = (x_p.size * 4 + Bp * C * 4
                      + (w1_p.size + w2_p.size + w3_p.size) * 2
                      + (b1_p.size + b2_p.size) * 4)
    vmem_limit = int(budget)

    kwargs = dict(TM=TM, Bp=Bp, input_dim=input_dim, W=W, C=C,
                  vmem_limit=vmem_limit, flops=flops,
                  bytes_accessed=bytes_accessed)
    try:
        out = _build_and_run(x_p, w1_p, b1_p, w2_p, b2_p, w3_p,
                             single_buffer_weights=True, **kwargs)
        out = jax.block_until_ready(out)
    except Exception:
        # Fallback for Pallas versions that reject pl.Buffered(1): default
        # (double-buffered) specs for the resident weights.
        out = _build_and_run(x_p, w1_p, b1_p, w2_p, b2_p, w3_p,
                             single_buffer_weights=False, **kwargs)
        out = jax.block_until_ready(out)

    return out[:B, :num_classes]


def make_params(key, input_dim, width, num_classes):
    ks = jax.random.split(key, 11)
    # Linear weights, stored (in, out) — PyTorch weight (out, in) transposed.
    w1 = jax.random.normal(ks[0], (input_dim, width), jnp.float32) / jnp.sqrt(input_dim)
    w2 = jax.random.normal(ks[1], (width, width), jnp.float32) / jnp.sqrt(width)
    w3 = jax.random.normal(ks[2], (width, num_classes), jnp.float32) / jnp.sqrt(width)
    # BatchNorm1d parameters (inference form).
    eps = 1e-5
    gamma1 = 1.0 + 0.1 * jax.random.normal(ks[3], (width,), jnp.float32)
    beta1 = 0.1 * jax.random.normal(ks[4], (width,), jnp.float32)
    rmean1 = 0.1 * jax.random.normal(ks[5], (width,), jnp.float32)
    rvar1 = 1.0 + 0.1 * jax.random.uniform(ks[6], (width,), jnp.float32)
    gamma2 = 1.0 + 0.1 * jax.random.normal(ks[7], (width,), jnp.float32)
    beta2 = 0.1 * jax.random.normal(ks[8], (width,), jnp.float32)
    rmean2 = 0.1 * jax.random.normal(ks[9], (width,), jnp.float32)
    rvar2 = 1.0 + 0.1 * jax.random.uniform(ks[10], (width,), jnp.float32)
    s1 = (gamma1 / jnp.sqrt(rvar1 + eps)).reshape(1, width)
    b1 = (beta1 - rmean1 * gamma1 / jnp.sqrt(rvar1 + eps)).reshape(1, width)
    s2 = (gamma2 / jnp.sqrt(rvar2 + eps)).reshape(1, width)
    b2 = (beta2 - rmean2 * gamma2 / jnp.sqrt(rvar2 + eps)).reshape(1, width)
    return w1, s1, b1, w2, s2, b2, w3


def reference_forward(x, w1, s1, b1, w2, s2, b2, w3):
    h = jnp.maximum(x @ w1 * s1 + b1, 0.0)
    h = jnp.maximum(h @ w2 * s2 + b2, 0.0)
    return h @ w3


if __name__ == "__main__":
    # Small shapes consistent with the module's constructor signature.
    batch = 8
    input_dim = 64     # stands in for 28*28
    width = 32         # stands in for 50
    depth = 3          # -> exactly one hidden Linear+BN+ReLU block
    num_classes = 10

    key = jax.random.PRNGKey(0)
    kx, kp = jax.random.split(key)
    # Input could be e.g. (B, 1, 8, 8) NCHW; forward flattens to (B, input_dim).
    x_img = jax.random.normal(kx, (batch, 1, 8, 8), jnp.float32)
    x = x_img.reshape(batch, input_dim)  # x.view(x.size(0), input_dim)

    params = make_params(kp, input_dim, width, num_classes)

    out = fully_connected_forward(x, *params)
    out = jax.block_until_ready(out)

    ref = reference_forward(x, *params)
    assert out.shape == (batch, num_classes)
    # bf16 matmul inputs (f32 accumulation) -> loosened tolerance.
    assert jnp.allclose(out, ref, atol=3e-2, rtol=3e-2), (
        float(jnp.max(jnp.abs(out - ref))))

    print("KERNEL_OK")
</pallas_src>

<mosaic_0001>
module attributes {stable_mosaic.version = 11 : i64} {
  func.func @mlp_kernel(%arg0: i32, %arg1: memref<16x64xf32, #tpu.memory_space<vmem>>, %arg2: memref<64x128xbf16, #tpu.memory_space<vmem>>, %arg3: memref<1x128xf32, #tpu.memory_space<vmem>>, %arg4: memref<128x128xbf16, #tpu.memory_space<vmem>>, %arg5: memref<1x128xf32, #tpu.memory_space<vmem>>, %arg6: memref<128x128xbf16, #tpu.memory_space<vmem>>, %arg7: memref<16x128xf32, #tpu.memory_space<vmem>>) attributes {dimension_semantics = [#tpu.dimension_semantics<parallel>], iteration_bounds = array<i64: 1>, scalar_prefetch = 0 : i64, scratch_operands = 0 : i64, tpu.core_type = #tpu.core_type<tc>, window_params = [{transform_indices = @transform_0, window_bounds = array<i64: 16, 64>}, {pipeline_mode = #tpu.pipeline_mode<synchronous>, transform_indices = @transform_1, window_bounds = array<i64: 64, 128>}, {pipeline_mode = #tpu.pipeline_mode<synchronous>, transform_indices = @transform_2, window_bounds = array<i64: 1, 128>}, {pipeline_mode = #tpu.pipeline_mode<synchronous>, transform_indices = @transform_3, window_bounds = array<i64: 128, 128>}, {pipeline_mode = #tpu.pipeline_mode<synchronous>, transform_indices = @transform_4, window_bounds = array<i64: 1, 128>}, {pipeline_mode = #tpu.pipeline_mode<synchronous>, transform_indices = @transform_5, window_bounds = array<i64: 128, 128>}, {transform_indices = @transform_6, window_bounds = array<i64: 16, 128>}]} {
    %c0 = arith.constant 0 : index
    %c0_0 = arith.constant 0 : index
    %0 = vector.load %arg1[%c0, %c0_0] : memref<16x64xf32, #tpu.memory_space<vmem>>, vector<16x64xf32>
    %1 = arith.truncf %0 : vector<16x64xf32> to vector<16x64xbf16>
    %c0_1 = arith.constant 0 : index
    %c0_2 = arith.constant 0 : index
    %2 = vector.load %arg2[%c0_1, %c0_2] : memref<64x128xbf16, #tpu.memory_space<vmem>>, vector<64x128xbf16>
    %cst = arith.constant dense<0.000000e+00> : vector<16x128xf32>
    %3 = tpu.matmul %1, %2, %cst {dimension_numbers = #tpu.dot_dimension_numbers<[1], [0], [0], [1], [0, 0, 1, 1], [], []>} : vector<16x64xbf16>, vector<64x128xbf16>, vector<16x128xf32> -> vector<16x128xf32>
    %c0_3 = arith.constant 0 : index
    %c0_4 = arith.constant 0 : index
    %4 = vector.load %arg3[%c0_3, %c0_4] : memref<1x128xf32, #tpu.memory_space<vmem>>, vector<1x128xf32>
    %5 = vector.broadcast %4 : vector<1x128xf32> to vector<16x128xf32>
    %6 = arith.addf %3, %5 : vector<16x128xf32>
    %cst_5 = arith.constant 0.000000e+00 : f32
    %7 = vector.broadcast %cst_5 : f32 to vector<16x128xf32>
    %8 = arith.maximumf %6, %7 : vector<16x128xf32>
    %9 = arith.truncf %8 : vector<16x128xf32> to vector<16x128xbf16>
    %c0_6 = arith.constant 0 : index
    %c0_7 = arith.constant 0 : index
    %10 = vector.load %arg4[%c0_6, %c0_7] : memref<128x128xbf16, #tpu.memory_space<vmem>>, vector<128x128xbf16>
    %cst_8 = arith.constant dense<0.000000e+00> : vector<16x128xf32>
    %11 = tpu.matmul %9, %10, %cst_8 {dimension_numbers = #tpu.dot_dimension_numbers<[1], [0], [0], [1], [0, 0, 1, 1], [], []>} : vector<16x128xbf16>, vector<128x128xbf16>, vector<16x128xf32> -> vector<16x128xf32>
    %c0_9 = arith.constant 0 : index
    %c0_10 = arith.constant 0 : index
    %12 = vector.load %arg5[%c0_9, %c0_10] : memref<1x128xf32, #tpu.memory_space<vmem>>, vector<1x128xf32>
    %13 = vector.broadcast %12 : vector<1x128xf32> to vector<16x128xf32>
    %14 = arith.addf %11, %13 : vector<16x128xf32>
    %cst_11 = arith.constant 0.000000e+00 : f32
    %15 = vector.broadcast %cst_11 : f32 to vector<16x128xf32>
    %16 = arith.maximumf %14, %15 : vector<16x128xf32>
    %17 = arith.truncf %16 : vector<16x128xf32> to vector<16x128xbf16>
    %c0_12 = arith.constant 0 : index
    %c0_13 = arith.constant 0 : index
    %18 = vector.load %arg6[%c0_12, %c0_13] : memref<128x128xbf16, #tpu.memory_space<vmem>>, vector<128x128xbf16>
    %cst_14 = arith.constant dense<0.000000e+00> : vector<16x128xf32>
    %19 = tpu.matmul %17, %18, %cst_14 {dimension_numbers = #tpu.dot_dimension_numbers<[1], [0], [0], [1], [0, 0, 1, 1], [], []>} : vector<16x128xbf16>, vector<128x128xbf16>, vector<16x128xf32> -> vector<16x128xf32>
    %c0_15 = arith.constant 0 : index
    %c0_16 = arith.constant 0 : index
    %20 = vector.load %arg7[%c0_15, %c0_16] : memref<16x128xf32, #tpu.memory_space<vmem>>, vector<16x128xf32>
    tpu.vector_store %arg7[%c0_15, %c0_16], %19 {strides = array<i32>} : memref<16x128xf32, #tpu.memory_space<vmem>>, vector<16x128xf32>,
    return
  }
  func.func @transform_0(%arg0: i32) -> (i32, i32) {
    %c0_i32 = arith.constant 0 : i32
    %c0_i32_0 = arith.constant 0 : i32
    return %arg0, %c0_i32 : i32, i32
  }
  func.func @transform_1(%arg0: i32) -> (i32, i32) {
    %c0_i32 = arith.constant 0 : i32
    %c0_i32_0 = arith.constant 0 : i32
    %c0_i32_1 = arith.constant 0 : i32
    return %c0_i32, %c0_i32_0 : i32, i32
  }
  func.func @transform_2(%arg0: i32) -> (i32, i32) {
    %c0_i32 = arith.constant 0 : i32
    %c0_i32_0 = arith.constant 0 : i32
    %c0_i32_1 = arith.constant 0 : i32
    return %c0_i32, %c0_i32_0 : i32, i32
  }
  func.func @transform_3(%arg0: i32) -> (i32, i32) {
    %c0_i32 = arith.constant 0 : i32
    %c0_i32_0 = arith.constant 0 : i32
    %c0_i32_1 = arith.constant 0 : i32
    return %c0_i32, %c0_i32_0 : i32, i32
  }
  func.func @transform_4(%arg0: i32) -> (i32, i32) {
    %c0_i32 = arith.constant 0 : i32
    %c0_i32_0 = arith.constant 0 : i32
    %c0_i32_1 = arith.constant 0 : i32
    return %c0_i32, %c0_i32_0 : i32, i32
  }
  func.func @transform_5(%arg0: i32) -> (i32, i32) {
    %c0_i32 = arith.constant 0 : i32
    %c0_i32_0 = arith.constant 0 : i32
    %c0_i32_1 = arith.constant 0 : i32
    return %c0_i32, %c0_i32_0 : i32, i32
  }
  func.func @transform_6(%arg0: i32) -> (i32, i32) {
    %c0_i32 = arith.constant 0 : i32
    %c0_i32_0 = arith.constant 0 : i32
    return %arg0, %c0_i32 : i32, i32
  }
}

module attributes {stable_mosaic.version = 11 : i64} {
  func.func @mlp_kernel(%arg0: i32, %arg1: memref<16x64xf32, #tpu.memory_space<vmem>>, %arg2: memref<64x128xbf16, #tpu.memory_space<vmem>>, %arg3: memref<1x128xf32, #tpu.memory_space<vmem>>, %arg4: memref<128x128xbf16, #tpu.memory_space<vmem>>, %arg5: memref<1x128xf32, #tpu.memory_space<vmem>>, %arg6: memref<128x128xbf16, #tpu.memory_space<vmem>>, %arg7: memref<16x128xf32, #tpu.memory_space<vmem>>) attributes {dimension_semantics = [#tpu.dimension_semantics<parallel>], iteration_bounds = array<i64: 1>, scalar_prefetch = 0 : i64, scratch_operands = 0 : i64, tpu.core_type = #tpu.core_type<tc>, window_params = [{transform_indices = @transform_0, window_bounds = array<i64: 16, 64>}, {pipeline_mode = #tpu.pipeline_mode<synchronous>, transform_indices = @transform_1, window_bounds = array<i64: 64, 128>}, {pipeline_mode = #tpu.pipeline_mode<synchronous>, transform_indices = @transform_2, window_bounds = array<i64: 1, 128>}, {pipeline_mode = #tpu.pipeline_mode<synchronous>, transform_indices = @transform_3, window_bounds = array<i64: 128, 128>}, {pipeline_mode = #tpu.pipeline_mode<synchronous>, transform_indices = @transform_4, window_bounds = array<i64: 1, 128>}, {pipeline_mode = #tpu.pipeline_mode<synchronous>, transform_indices = @transform_5, window_bounds = array<i64: 128, 128>}, {transform_indices = @transform_6, window_bounds = array<i64: 16, 128>}]} {
    %c0 = arith.constant 0 : index
    %c0_0 = arith.constant 0 : index
    %0 = vector.load %arg1[%c0, %c0_0] : memref<16x64xf32, #tpu.memory_space<vmem>>, vector<16x64xf32>
    %1 = arith.truncf %0 : vector<16x64xf32> to vector<16x64xbf16>
    %c0_1 = arith.constant 0 : index
    %c0_2 = arith.constant 0 : index
    %2 = vector.load %arg2[%c0_1, %c0_2] : memref<64x128xbf16, #tpu.memory_space<vmem>>, vector<64x128xbf16>
    %cst = arith.constant dense<0.000000e+00> : vector<16x128xf32>
    %3 = tpu.matmul %1, %2, %cst {dimension_numbers = #tpu.dot_dimension_numbers<[1], [0], [0], [1], [0, 0, 1, 1], [], []>} : vector<16x64xbf16>, vector<64x128xbf16>, vector<16x128xf32> -> vector<16x128xf32>
    %c0_3 = arith.constant 0 : index
    %c0_4 = arith.constant 0 : index
    %4 = vector.load %arg3[%c0_3, %c0_4] : memref<1x128xf32, #tpu.memory_space<vmem>>, vector<1x128xf32>
    %5 = vector.broadcast %4 : vector<1x128xf32> to vector<16x128xf32>
    %6 = arith.addf %3, %5 : vector<16x128xf32>
    %cst_5 = arith.constant 0.000000e+00 : f32
    %7 = vector.broadcast %cst_5 : f32 to vector<16x128xf32>
    %8 = arith.maximumf %6, %7 : vector<16x128xf32>
    %9 = arith.truncf %8 : vector<16x128xf32> to vector<16x128xbf16>
    %c0_6 = arith.constant 0 : index
    %c0_7 = arith.constant 0 : index
    %10 = vector.load %arg4[%c0_6, %c0_7] : memref<128x128xbf16, #tpu.memory_space<vmem>>, vector<128x128xbf16>
    %cst_8 = arith.constant dense<0.000000e+00> : vector<16x128xf32>
    %11 = tpu.matmul %9, %10, %cst_8 {dimension_numbers = #tpu.dot_dimension_numbers<[1], [0], [0], [1], [0, 0, 1, 1], [], []>} : vector<16x128xbf16>, vector<128x128xbf16>, vector<16x128xf32> -> vector<16x128xf32>
    %c0_9 = arith.constant 0 : index
    %c0_10 = arith.constant 0 : index
    %12 = vector.load %arg5[%c0_9, %c0_10] : memref<1x128xf32, #tpu.memory_space<vmem>>, vector<1x128xf32>
    %13 = vector.broadcast %12 : vector<1x128xf32> to vector<16x128xf32>
    %14 = arith.addf %11, %13 : vector<16x128xf32>
    %cst_11 = arith.constant 0.000000e+00 : f32
    %15 = vector.broadcast %cst_11 : f32 to vector<16x128xf32>
    %16 = arith.maximumf %14, %15 : vector<16x128xf32>
    %17 = arith.truncf %16 : vector<16x128xf32> to vector<16x128xbf16>
    %c0_12 = arith.constant 0 : index
    %c0_13 = arith.constant 0 : index
    %18 = vector.load %arg6[%c0_12, %c0_13] : memref<128x128xbf16, #tpu.memory_space<vmem>>, vector<128x128xbf16>
    %cst_14 = arith.constant dense<0.000000e+00> : vector<16x128xf32>
    %19 = tpu.matmul %17, %18, %cst_14 {dimension_numbers = #tpu.dot_dimension_numbers<[1], [0], [0], [1], [0, 0, 1, 1], [], []>} : vector<16x128xbf16>, vector<128x128xbf16>, vector<16x128xf32> -> vector<16x128xf32>
    %c0_15 = arith.constant 0 : index
    %c0_16 = arith.constant 0 : index
    %20 = vector.load %arg7[%c0_15, %c0_16] : memref<16x128xf32, #tpu.memory_space<vmem>>, vector<16x128xf32>
    tpu.vector_store %arg7[%c0_15, %c0_16], %19 {strides = array<i32>} : memref<16x128xf32, #tpu.memory_space<vmem>>, vector<16x128xf32>,
    return
  }
  func.func @transform_0(%arg0: i32) -> (i32, i32) {
    %c0_i32 = arith.constant 0 : i32
    %c0_i32_0 = arith.constant 0 : i32
    return %arg0, %c0_i32 : i32, i32
  }
  func.func @transform_1(%arg0: i32) -> (i32, i32) {
    %c0_i32 = arith.constant 0 : i32
    %c0_i32_0 = arith.constant 0 : i32
    %c0_i32_1 = arith.constant 0 : i32
    return %c0_i32, %c0_i32_0 : i32, i32
  }
  func.func @transform_2(%arg0: i32) -> (i32, i32) {
    %c0_i32 = arith.constant 0 : i32
    %c0_i32_0 = arith.constant 0 : i32
    %c0_i32_1 = arith.constant 0 : i32
    return %c0_i32, %c0_i32_0 : i32, i32
  }
  func.func @transform_3(%arg0: i32) -> (i32, i32) {
    %c0_i32 = arith.constant 0 : i32
    %c0_i32_0 = arith.constant 0 : i32
    %c0_i32_1 = arith.constant 0 : i32
    return %c0_i32, %c0_i32_0 : i32, i32
  }
  func.func @transform_4(%arg0: i32) -> (i32, i32) {
    %c0_i32 = arith.constant 0 : i32
    %c0_i32_0 = arith.constant 0 : i32
    %c0_i32_1 = arith.constant 0 : i32
    return %c0_i32, %c0_i32_0 : i32, i32
  }
  func.func @transform_5(%arg0: i32) -> (i32, i32) {
    %c0_i32 = arith.constant 0 : i32
    %c0_i32_0 = arith.constant 0 : i32
    %c0_i32_1 = arith.constant 0 : i32
    return %c0_i32, %c0_i32_0 : i32, i32
  }
  func.func @transform_6(%arg0: i32) -> (i32, i32) {
    %c0_i32 = arith.constant 0 : i32
    %c0_i32_0 = arith.constant 0 : i32
    return %arg0, %c0_i32 : i32, i32
  }
}

</mosaic_0001>

<llo_original>
// kernel: tpu_custom_call.1
$region0: #{tpu_custom_call.1}
  #allocation0 [shape = 'u32[]', space=smem, size = 0x4, offset = 0x4, fixed_abs, tag = 'smem constant byte address 0x4 - core index']
  #allocation1 [shape = 'u32[144,128]{1,0:T(1,128)}', space=vmem, size = 0x12000, scoped, tag = 'internal scratch']
  %s0 = inlined_call_operand.hbm [shape: f32[16,64], index: 0, kind: input, shape index: {}]
  %s1 = inlined_call_operand.hbm [shape: bf16[64,128], index: 1, kind: input, shape index: {}]
  %s2 = inlined_call_operand.vmem [shape: f32[1,128], index: 2, kind: input, shape index: {}]
  %s3 = inlined_call_operand.hbm [shape: bf16[128,128], index: 3, kind: input, shape index: {}]
  %s4 = inlined_call_operand.vmem [shape: f32[1,128], index: 4, kind: input, shape index: {}]
  %s5 = inlined_call_operand.hbm [shape: bf16[128,128], index: 5, kind: input, shape index: {}]
  %s6 = inlined_call_operand.hbm [shape: f32[16,128], index: 6, kind: output, shape index: {}]
  %s7 = sld [smem:[#allocation0]]
  $region50: #{tpu_custom_call.1} parent=0
    _
  %s9 = ssub.s32 1, %s7
  %s10 = scalar_select 0, %s9, %s7
  $region1: #{tpu_custom_call.1} parent=0
    #allocation2 [shape = 'u8[8192]{0}', space=vmem, size = 0x2000, scoped, tag = 'input window, operand 0, single buffered']
    #allocation3 [shape = 's32[1]{0}', space=sflag, size = 0x4, scoped, tag = 'scoped memory for tpu_custom_call.1']
    #allocation4 [shape = 's32[1]{0}', space=sflag, size = 0x4, scoped, tag = 'scoped memory for tpu_custom_call.1']
    #allocation5 [shape = 'u8[16384]{0}', space=vmem, size = 0x4000, scoped, tag = 'input window, operand 1, single buffered']
    #allocation6 [shape = 's32[1]{0}', space=sflag, size = 0x4, scoped, tag = 'scoped memory for tpu_custom_call.1']
    #allocation7 [shape = 'u8[32768]{0}', space=vmem, size = 0x8000, scoped, tag = 'input window, operand 3, single buffered']
    #allocation8 [shape = 'u8[32768]{0}', space=vmem, size = 0x8000, scoped, tag = 'input window, operand 5, single buffered']
    #allocation9 [shape = 's32[1]{0}', space=sflag, size = 0x4, scoped, tag = 'scoped memory for tpu_custom_call.1']
    #allocation10 [shape = 'u8[8192]{0}', space=vmem, size = 0x2000, scoped, tag = 'output window, operand 0, single buffered']
    %11 = vsyncpa [#allocation3], 0
    %12 = vsyncpa [#allocation6], 0
    %13 = vsyncpa [#allocation9], 0
    %14 = vsyncpa [#allocation4], 0
    // Predicated region
    $region2: #{tpu_custom_call.1} parent=1 // pred_check
      _
    $region3: #{tpu_custom_call.1} parent=1 // pred_check_branch
      %16 = sbr.rel (0) target = $region5
    $region4: #{tpu_custom_call.1} parent=1 // pred_region
      %s18 = ssub.s32 256, 256
      %19 = vsyncadd [#allocation3], %s18
      %s20 = sshll.u32 [#allocation2], 4
      %s21 = int_to_ptr.vmem [resolvable:$true] %s20
      %26 = dma.hbm_to_vmem [thread:$0]  %s0, 256, %s21, [#allocation3], 128, 128, 8
    $region5: #{tpu_custom_call.1} parent=1 // pred_fallthru
      _
    // Predicated region
    $region6: #{tpu_custom_call.1} parent=1 // pred_check
      _
    $region7: #{tpu_custom_call.1} parent=1 // pred_check_branch
      %28 = sbr.rel (0) target = $region9
    $region8: #{tpu_custom_call.1} parent=1 // pred_region
      %s30 = ssub.s32 512, 512
      %31 = vsyncadd [#allocation6], %s30
      %s32 = sshll.u32 [#allocation5], 4
      %s33 = int_to_ptr.vmem [resolvable:$true] %s32
      %38 = dma.hbm_to_vmem [thread:$0]  %s1, 512, %s33, [#allocation6], 64, 64, 4
    $region9: #{tpu_custom_call.1} parent=1 // pred_fallthru
      _
    // Predicated region
    $region10: #{tpu_custom_call.1} parent=1 // pred_check
      _
    $region11: #{tpu_custom_call.1} parent=1 // pred_check_branch
      %40 = sbr.rel (0) target = $region13
    $region12: #{tpu_custom_call.1} parent=1 // pred_region
      _
    $region13: #{tpu_custom_call.1} parent=1 // pred_fallthru
      _
    // Predicated region
    $region14: #{tpu_custom_call.1} parent=1 // pred_check
      _
    $region15: #{tpu_custom_call.1} parent=1 // pred_check_branch
      %42 = sbr.rel (0) target = $region17
    $region16: #{tpu_custom_call.1} parent=1 // pred_region
      %s44 = ssub.s32 1024, 1024
      %45 = vsyncadd [#allocation6], %s44
      %s46 = sshll.u32 [#allocation7], 4
      %s47 = int_to_ptr.vmem [resolvable:$true] %s46
      %52 = dma.hbm_to_vmem [thread:$0]  %s3, 1024, %s47, [#allocation6], 64, 64, 4
    $region17: #{tpu_custom_call.1} parent=1 // pred_fallthru
      _
    // Predicated region
    $region18: #{tpu_custom_call.1} parent=1 // pred_check
      _
    $region19: #{tpu_custom_call.1} parent=1 // pred_check_branch
      %54 = sbr.rel (0) target = $region21
    $region20: #{tpu_custom_call.1} parent=1 // pred_region
      _
    $region21: #{tpu_custom_call.1} parent=1 // pred_fallthru
      _
    // Predicated region
    $region22: #{tpu_custom_call.1} parent=1 // pred_check
      _
    $region23: #{tpu_custom_call.1} parent=1 // pred_check_branch
      %56 = sbr.rel (0) target = $region25
    $region24: #{tpu_custom_call.1} parent=1 // pred_region
      %s58 = ssub.s32 1024, 1024
      %59 = vsyncadd [#allocation9], %s58
      %s60 = sshll.u32 [#allocation8], 4
      %s61 = int_to_ptr.vmem [resolvable:$true] %s60
      %66 = dma.hbm_to_vmem [thread:$0]  %s5, 1024, %s61, [#allocation9], 64, 64, 4
    $region25: #{tpu_custom_call.1} parent=1 // pred_fallthru
      _
    // Predicated region
    $region26: #{tpu_custom_call.1} parent=1 // pred_check
      _
    $region27: #{tpu_custom_call.1} parent=1 // pred_check_branch
      %68 = sbr.rel (0) target = $region29
    $region28: #{tpu_custom_call.1} parent=1 // pred_region
      %69 = dma.done [#allocation3], 256
    $region29: #{tpu_custom_call.1} parent=1 // pred_fallthru
      _
    // Predicated region
    $region30: #{tpu_custom_call.1} parent=1 // pred_check
      _
    $region31: #{tpu_custom_call.1} parent=1 // pred_check_branch
      %71 = sbr.rel (0) target = $region33
    $region32: #{tpu_custom_call.1} parent=1 // pred_region
      %72 = dma.done [#allocation6], 512
    $region33: #{tpu_custom_call.1} parent=1 // pred_fallthru
      _
    // Predicated region
    $region34: #{tpu_custom_call.1} parent=1 // pred_check
      _
    $region35: #{tpu_custom_call.1} parent=1 // pred_check_branch
      %74 = sbr.rel (0) target = $region37
    $region36: #{tpu_custom_call.1} parent=1 // pred_region
      %75 = dma.done [#allocation6], 1024
    $region37: #{tpu_custom_call.1} parent=1 // pred_fallthru
      _
    // Predicated region
    $region38: #{tpu_custom_call.1} parent=1 // pred_check
      _
    $region39: #{tpu_custom_call.1} parent=1 // pred_check_branch
      %77 = sbr.rel (0) target = $region41
    $region40: #{tpu_custom_call.1} parent=1 // pred_region
      %78 = dma.done [#allocation9], 1024
    $region41: #{tpu_custom_call.1} parent=1 // pred_fallthru
      _
    %v80 = vld [vmem:[#allocation2] sm:$0xff]
    %v81 = vld [vmem:[#allocation2 + $0x8] sm:$0xff]
    %v82 = vpack.c.bf16 %v81, %v80
    %v83 = vld [vmem:[#allocation5] sm:$0xf]
    %v84 = vld [vmem:[#allocation5 + $0x4] sm:$0xf]
    %v85 = vld [vmem:[#allocation5 + $0x8] sm:$0xf]
    %v86 = vld [vmem:[#allocation5 + $0xc] sm:$0xf]
    %v87 = vld [vmem:[#allocation5 + $0x10] sm:$0xf]
    %v88 = vld [vmem:[#allocation5 + $0x14] sm:$0xf]
    %v89 = vld [vmem:[#allocation5 + $0x18] sm:$0xf]
    %v90 = vld [vmem:[#allocation5 + $0x1c] sm:$0xf]
    %v91 = vld [vmem:[%s2] sm:$0x1]
    %v93 = vlaneseq
    %v94 = vshrl.u32 %v93, 7
    %v95 = vsub.s32 0, %v94
    %v96 = vrot.slane %v91, %v95
    %v106 = vunpack.c.l.b16 %v83
    %v107 = vunpack.c.l.b16 %v84
    %v108 = vunpack.c.l.b16 %v85
    %v109 = vunpack.c.l.b16 %v86
    %v110 = vunpack.c.l.b16 %v87
    %v111 = vunpack.c.l.b16 %v88
    %v112 = vunpack.c.l.b16 %v89
    %v113 = vunpack.c.l.b16 %v90
    %v114 = vpack.c.b16 %v107, %v106
    %v115 = vpack.c.b16 %v109, %v108
    %v116 = vpack.c.b16 %v111, %v110
    %v117 = vpack.c.b16 %v113, %v112
    %vm122 = vcmask 523264
    %v124 = vsel %vm122, %v82, 0
    %126 = vmatprep.subr.bf16.mxu0 0
    %127 = vmatpush1.bf16.msra.mxu0 0
    %128 = vmatprep.subr.bf16.mxu0 0
    %129 = vmatpush1.bf16.msra.mxu0 0
    %130 = vmatprep.subr.bf16.mxu0 0
    %131 = vmatpush1.bf16.msra.mxu0 0
    %132 = vmatprep.subr.bf16.mxu0 0
    %133 = vmatpush1.bf16.msra.mxu0 0
    %134 = vmatprep.subr.bf16.mxu0 0
    %135 = vmatpush1.bf16.msra.mxu0 %v117
    %136 = vmatprep.subr.bf16.mxu0 0
    %137 = vmatpush1.bf16.msra.mxu0 %v116
    %138 = vmatprep.subr.bf16.mxu0 0
    %139 = vmatpush1.bf16.msra.mxu0 %v115
    %140 = vmatprep.subr.bf16.mxu0 0
    %141 = vmatpush1.bf16.msra.mxu0 %v114
    %142 = vmatprep.subr.bf16.mxu0 0
    %143 = vmatpush2.bf16.msra.mxu0 0
    %144 = vmatprep.subr.bf16.mxu0 0
    %145 = vmatpush2.bf16.msra.mxu0 0
    %146 = vmatprep.subr.bf16.mxu0 0
    %147 = vmatpush2.bf16.msra.mxu0 0
    %148 = vmatprep.subr.bf16.mxu0 0
    %149 = vmatpush2.bf16.msra.mxu0 0
    %150 = vmatprep.subr.bf16.mxu0 0
    %151 = vmatpush2.bf16.msra.mxu0 0
    %152 = vmatprep.subr.bf16.mxu0 0
    %153 = vmatpush2.bf16.msra.mxu0 0
    %154 = vmatprep.subr.bf16.mxu0 0
    %155 = vmatpush2.bf16.msra.mxu0 0
    %156 = vmatprep.subr.bf16.mxu0 0
    %157 = vmatpush2.bf16.msra.mxu0 0
    %158 = vmatprep.mubr.bf16.mxu0 0
    %159 = vmatmul.mubr.bf16.gmra.mxu0 %v124
    %v160 = vpop.f32.mrf.mxu0
    %v161 = vadd.f32 %v96, %v160
    %v162 = vpop.f32.mrf.mxu0
    %v163 = vpop.f32.mrf.mxu0
    %v164 = vadd.f32 %v96, %v163
    %v165 = vpop.f32.mrf.mxu0
    %166 = vdwg.mxu0
    %v167 = vmax.f32 %v161, 0.0
    %v168 = vmax.f32 %v164, 0.0
    %v169 = vpack.c.bf16 %v168, %v167
    %v170 = vld [vmem:[#allocation7] sm:$0xf]
    %v171 = vld [vmem:[#allocation7 + $0x4] sm:$0xf]
    %v172 = vld [vmem:[#allocation7 + $0x8] sm:$0xf]
    %v173 = vld [vmem:[#allocation7 + $0xc] sm:$0xf]
    %v174 = vld [vmem:[#allocation7 + $0x10] sm:$0xf]
    %v175 = vld [vmem:[#allocation7 + $0x14] sm:$0xf]
    %v176 = vld [vmem:[#allocation7 + $0x18] sm:$0xf]
    %v177 = vld [vmem:[#allocation7 + $0x1c] sm:$0xf]
    %v178 = vld [vmem:[#allocation7 + $0x20] sm:$0xf]
    %v179 = vld [vmem:[#allocation7 + $0x24] sm:$0xf]
    %v180 = vld [vmem:[#allocation7 + $0x28] sm:$0xf]
    %v181 = vld [vmem:[#allocation7 + $0x2c] sm:$0xf]
    %v182 = vld [vmem:[#allocation7 + $0x30] sm:$0xf]
    %v183 = vld [vmem:[#allocation7 + $0x34] sm:$0xf]
    %v184 = vld [vmem:[#allocation7 + $0x38] sm:$0xf]
    %v185 = vld [vmem:[#allocation7 + $0x3c] sm:$0xf]
    %v186 = vld [vmem:[%s4] sm:$0x1]
    %v188 = vlaneseq
    %v189 = vshrl.u32 %v188, 7
    %v190 = vsub.s32 0, %v189
    %v191 = vrot.slane %v186, %v190
    %v209 = vunpack.c.l.b16 %v170
    %v210 = vunpack.c.l.b16 %v171
    %v211 = vunpack.c.l.b16 %v172
    %v212 = vunpack.c.l.b16 %v173
    %v213 = vunpack.c.l.b16 %v174
    %v214 = vunpack.c.l.b16 %v175
    %v215 = vunpack.c.l.b16 %v176
    %v216 = vunpack.c.l.b16 %v177
    %v217 = vunpack.c.l.b16 %v178
    %v218 = vunpack.c.l.b16 %v179
    %v219 = vunpack.c.l.b16 %v180
    %v220 = vunpack.c.l.b16 %v181
    %v221 = vunpack.c.l.b16 %v182
    %v222 = vunpack.c.l.b16 %v183
    %v223 = vunpack.c.l.b16 %v184
    %v224 = vunpack.c.l.b16 %v185
    %v225 = vpack.c.b16 %v210, %v209
    %v226 = vpack.c.b16 %v212, %v211
    %v227 = vpack.c.b16 %v214, %v213
    %v228 = vpack.c.b16 %v216, %v215
    %v229 = vpack.c.b16 %v218, %v217
    %v230 = vpack.c.b16 %v220, %v219
    %v231 = vpack.c.b16 %v222, %v221
    %v232 = vpack.c.b16 %v224, %v223
    %241 = vmatprep.subr.bf16.mxu0 0
    %242 = vmatpush1.bf16.msra.mxu0 %v232
    %243 = vmatprep.subr.bf16.mxu0 0
    %244 = vmatpush1.bf16.msra.mxu0 %v231
    %245 = vmatprep.subr.bf16.mxu0 0
    %246 = vmatpush1.bf16.msra.mxu0 %v230
    %247 = vmatprep.subr.bf16.mxu0 0
    %248 = vmatpush1.bf16.msra.mxu0 %v229
    %249 = vmatprep.subr.bf16.mxu0 0
    %250 = vmatpush1.bf16.msra.mxu0 %v228
    %251 = vmatprep.subr.bf16.mxu0 0
    %252 = vmatpush1.bf16.msra.mxu0 %v227
    %253 = vmatprep.subr.bf16.mxu0 0
    %254 = vmatpush1.bf16.msra.mxu0 %v226
    %255 = vmatprep.subr.bf16.mxu0 0
    %256 = vmatpush1.bf16.msra.mxu0 %v225
    %257 = vmatprep.subr.bf16.mxu0 0
    %258 = vmatpush2.bf16.msra.mxu0 0
    %259 = vmatprep.subr.bf16.mxu0 0
    %260 = vmatpush2.bf16.msra.mxu0 0
    %261 = vmatprep.subr.bf16.mxu0 0
    %262 = vmatpush2.bf16.msra.mxu0 0
    %263 = vmatprep.subr.bf16.mxu0 0
    %264 = vmatpush2.bf16.msra.mxu0 0
    %265 = vmatprep.subr.bf16.mxu0 0
    %266 = vmatpush2.bf16.msra.mxu0 0
    %267 = vmatprep.subr.bf16.mxu0 0
    %268 = vmatpush2.bf16.msra.mxu0 0
    %269 = vmatprep.subr.bf16.mxu0 0
    %270 = vmatpush2.bf16.msra.mxu0 0
    %271 = vmatprep.subr.bf16.mxu0 0
    %272 = vmatpush2.bf16.msra.mxu0 0
    %273 = vmatprep.mubr.bf16.mxu0 0
    %274 = vmatmul.mubr.bf16.gmra.mxu0 %v169
    %v275 = vpop.f32.mrf.mxu0
    %v276 = vadd.f32 %v191, %v275
    %v277 = vpop.f32.mrf.mxu0
    %v278 = vpop.f32.mrf.mxu0
    %v279 = vadd.f32 %v191, %v278
    %v280 = vpop.f32.mrf.mxu0
    %281 = vdwg.mxu0
    %v282 = vmax.f32 %v276, 0.0
    %v283 = vmax.f32 %v279, 0.0
    %v284 = vpack.c.bf16 %v283, %v282
    %v285 = vld [vmem:[#allocation8] sm:$0xf]
    %v286 = vld [vmem:[#allocation8 + $0x4] sm:$0xf]
    %v287 = vld [vmem:[#allocation8 + $0x8] sm:$0xf]
    %v288 = vld [vmem:[#allocation8 + $0xc] sm:$0xf]
    %v289 = vld [vmem:[#allocation8 + $0x10] sm:$0xf]
    %v290 = vld [vmem:[#allocation8 + $0x14] sm:$0xf]
    %v291 = vld [vmem:[#allocation8 + $0x18] sm:$0xf]
    %v292 = vld [vmem:[#allocation8 + $0x1c] sm:$0xf]
    %v293 = vld [vmem:[#allocation8 + $0x20] sm:$0xf]
    %v294 = vld [vmem:[#allocation8 + $0x24] sm:$0xf]
    %v295 = vld [vmem:[#allocation8 + $0x28] sm:$0xf]
    %v296 = vld [vmem:[#allocation8 + $0x2c] sm:$0xf]
    %v297 = vld [vmem:[#allocation8 + $0x30] sm:$0xf]
    %v298 = vld [vmem:[#allocation8 + $0x34] sm:$0xf]
    %v299 = vld [vmem:[#allocation8 + $0x38] sm:$0xf]
    %v300 = vld [vmem:[#allocation8 + $0x3c] sm:$0xf]
    %v317 = vunpack.c.l.b16 %v285
    %v318 = vunpack.c.l.b16 %v286
    %v319 = vunpack.c.l.b16 %v287
    %v320 = vunpack.c.l.b16 %v288
    %v321 = vunpack.c.l.b16 %v289
    %v322 = vunpack.c.l.b16 %v290
    %v323 = vunpack.c.l.b16 %v291
    %v324 = vunpack.c.l.b16 %v292
    %v325 = vunpack.c.l.b16 %v293
    %v326 = vunpack.c.l.b16 %v294
    %v327 = vunpack.c.l.b16 %v295
    %v328 = vunpack.c.l.b16 %v296
    %v329 = vunpack.c.l.b16 %v297
    %v330 = vunpack.c.l.b16 %v298
    %v331 = vunpack.c.l.b16 %v299
    %v332 = vunpack.c.l.b16 %v300
    %v333 = vpack.c.b16 %v318, %v317
    %v334 = vpack.c.b16 %v320, %v319
    %v335 = vpack.c.b16 %v322, %v321
    %v336 = vpack.c.b16 %v324, %v323
    %v337 = vpack.c.b16 %v326, %v325
    %v338 = vpack.c.b16 %v328, %v327
    %v339 = vpack.c.b16 %v330, %v329
    %v340 = vpack.c.b16 %v332, %v331
    %349 = vmatprep.subr.bf16.mxu0 0
    %350 = vmatpush1.bf16.msra.mxu0 %v340
    %351 = vmatprep.subr.bf16.mxu0 0
    %352 = vmatpush1.bf16.msra.mxu0 %v339
    %353 = vmatprep.subr.bf16.mxu0 0
    %354 = vmatpush1.bf16.msra.mxu0 %v338
    %355 = vmatprep.subr.bf16.mxu0 0
    %356 = vmatpush1.bf16.msra.mxu0 %v337
    %357 = vmatprep.subr.bf16.mxu0 0
    %358 = vmatpush1.bf16.msra.mxu0 %v336
    %359 = vmatprep.subr.bf16.mxu0 0
    %360 = vmatpush1.bf16.msra.mxu0 %v335
    %361 = vmatprep.subr.bf16.mxu0 0
    %362 = vmatpush1.bf16.msra.mxu0 %v334
    %363 = vmatprep.subr.bf16.mxu0 0
    %364 = vmatpush1.bf16.msra.mxu0 %v333
    %365 = vmatprep.subr.bf16.mxu0 0
    %366 = vmatpush2.bf16.msra.mxu0 0
    %367 = vmatprep.subr.bf16.mxu0 0
    %368 = vmatpush2.bf16.msra.mxu0 0
    %369 = vmatprep.subr.bf16.mxu0 0
    %370 = vmatpush2.bf16.msra.mxu0 0
    %371 = vmatprep.subr.bf16.mxu0 0
    %372 = vmatpush2.bf16.msra.mxu0 0
    %373 = vmatprep.subr.bf16.mxu0 0
    %374 = vmatpush2.bf16.msra.mxu0 0
    %375 = vmatprep.subr.bf16.mxu0 0
    %376 = vmatpush2.bf16.msra.mxu0 0
    %377 = vmatprep.subr.bf16.mxu0 0
    %378 = vmatpush2.bf16.msra.mxu0 0
    %379 = vmatprep.subr.bf16.mxu0 0
    %380 = vmatpush2.bf16.msra.mxu0 0
    %381 = vmatprep.mubr.bf16.mxu0 0
    %382 = vmatmul.mubr.bf16.gmra.mxu0 %v284
    %v383 = vpop.f32.mrf.mxu0
    %v384 = vadd.f32 0.0, %v383
    %v385 = vpop.f32.mrf.mxu0
    %v386 = vpop.f32.mrf.mxu0
    %v387 = vadd.f32 0.0, %v386
    %v388 = vpop.f32.mrf.mxu0
    %389 = vdwg.mxu0
    %390 = vst [vmem:[#allocation10] sm:$0xff] %v384
    %391 = vst [vmem:[#allocation10 + $0x8] sm:$0xff] %v387
    // Predicated region
    $region42: #{tpu_custom_call.1} parent=1 // pred_check
      _
    $region43: #{tpu_custom_call.1} parent=1 // pred_check_branch
      %393 = sbr.rel (0) target = $region45
    $region44: #{tpu_custom_call.1} parent=1 // pred_region
      %s395 = ssub.s32 256, 256
      %396 = vsyncadd [#allocation4], %s395
      %s397 = sshll.u32 [#allocation10], 4
      %s398 = int_to_ptr.vmem [resolvable:$true] %s397
      %403 = dma.vmem_to_hbm [thread:$0]  %s398, 256, %s6, [#allocation4], 128, 128, 8
    $region45: #{tpu_custom_call.1} parent=1 // pred_fallthru
      _
    // Predicated region
    $region46: #{tpu_custom_call.1} parent=1 // pred_check
      _
    $region47: #{tpu_custom_call.1} parent=1 // pred_check_branch
      %405 = sbr.rel (0) target = $region49
    $region48: #{tpu_custom_call.1} parent=1 // pred_region
      %406 = dma.done [#allocation4], 256
    $region49: #{tpu_custom_call.1} parent=1 // pred_fallthru
      _
    %407 = vsyncpa [#allocation3], 1
    %408 = vsyncpa [#allocation6], 1
    %409 = vsyncpa [#allocation9], 1
    %410 = vsyncpa [#allocation4], 1

// kernel: tpu_custom_call.1
$region0: #{tpu_custom_call.1}
  #allocation0 [shape = 'u32[]', space=smem, size = 0x4, offset = 0x4, fixed_abs, tag = 'smem constant byte address 0x4 - core index']
  #allocation1 [shape = 'u32[144,128]{1,0:T(1,128)}', space=vmem, size = 0x12000, scoped, tag = 'internal scratch']
  %s0 = inlined_call_operand.hbm [shape: f32[16,64], index: 0, kind: input, shape index: {}]
  %s1 = inlined_call_operand.hbm [shape: bf16[64,128], index: 1, kind: input, shape index: {}]
  %s2 = inlined_call_operand.vmem [shape: f32[1,128], index: 2, kind: input, shape index: {}]
  %s3 = inlined_call_operand.hbm [shape: bf16[128,128], index: 3, kind: input, shape index: {}]
  %s4 = inlined_call_operand.vmem [shape: f32[1,128], index: 4, kind: input, shape index: {}]
  %s5 = inlined_call_operand.hbm [shape: bf16[128,128], index: 5, kind: input, shape index: {}]
  %s6 = inlined_call_operand.hbm [shape: f32[16,128], index: 6, kind: output, shape index: {}]
  %s7 = sld [smem:[#allocation0]]
  $region50: #{tpu_custom_call.1} parent=0
    _
  %s9 = ssub.s32 1, %s7
  %s10 = scalar_select 0, %s9, %s7
  $region1: #{tpu_custom_call.1} parent=0
    #allocation2 [shape = 'u8[8192]{0}', space=vmem, size = 0x2000, scoped, tag = 'input window, operand 0, single buffered']
    #allocation3 [shape = 's32[1]{0}', space=sflag, size = 0x4, scoped, tag = 'scoped memory for tpu_custom_call.1']
    #allocation4 [shape = 's32[1]{0}', space=sflag, size = 0x4, scoped, tag = 'scoped memory for tpu_custom_call.1']
    #allocation5 [shape = 'u8[16384]{0}', space=vmem, size = 0x4000, scoped, tag = 'input window, operand 1, single buffered']
    #allocation6 [shape = 's32[1]{0}', space=sflag, size = 0x4, scoped, tag = 'scoped memory for tpu_custom_call.1']
    #allocation7 [shape = 'u8[32768]{0}', space=vmem, size = 0x8000, scoped, tag = 'input window, operand 3, single buffered']
    #allocation8 [shape = 'u8[32768]{0}', space=vmem, size = 0x8000, scoped, tag = 'input window, operand 5, single buffered']
    #allocation9 [shape = 's32[1]{0}', space=sflag, size = 0x4, scoped, tag = 'scoped memory for tpu_custom_call.1']
    #allocation10 [shape = 'u8[8192]{0}', space=vmem, size = 0x2000, scoped, tag = 'output window, operand 0, single buffered']
    %11 = vsyncpa [#allocation3], 0
    %12 = vsyncpa [#allocation6], 0
    %13 = vsyncpa [#allocation9], 0
    %14 = vsyncpa [#allocation4], 0
    // Predicated region
    $region2: #{tpu_custom_call.1} parent=1 // pred_check
      _
    $region3: #{tpu_custom_call.1} parent=1 // pred_check_branch
      %16 = sbr.rel (0) target = $region5
    $region4: #{tpu_custom_call.1} parent=1 // pred_region
      %s18 = ssub.s32 256, 256
      %19 = vsyncadd [#allocation3], %s18
      %s20 = sshll.u32 [#allocation2], 4
      %s21 = int_to_ptr.vmem [resolvable:$true] %s20
      %26 = dma.hbm_to_vmem [thread:$0]  %s0, 256, %s21, [#allocation3], 128, 128, 8
    $region5: #{tpu_custom_call.1} parent=1 // pred_fallthru
      _
    // Predicated region
    $region6: #{tpu_custom_call.1} parent=1 // pred_check
      _
    $region7: #{tpu_custom_call.1} parent=1 // pred_check_branch
      %28 = sbr.rel (0) target = $region9
    $region8: #{tpu_custom_call.1} parent=1 // pred_region
      %s30 = ssub.s32 512, 512
      %31 = vsyncadd [#allocation6], %s30
      %s32 = sshll.u32 [#allocation5], 4
      %s33 = int_to_ptr.vmem [resolvable:$true] %s32
      %38 = dma.hbm_to_vmem [thread:$0]  %s1, 512, %s33, [#allocation6], 64, 64, 4
    $region9: #{tpu_custom_call.1} parent=1 // pred_fallthru
      _
    // Predicated region
    $region10: #{tpu_custom_call.1} parent=1 // pred_check
      _
    $region11: #{tpu_custom_call.1} parent=1 // pred_check_branch
      %40 = sbr.rel (0) target = $region13
    $region12: #{tpu_custom_call.1} parent=1 // pred_region
      _
    $region13: #{tpu_custom_call.1} parent=1 // pred_fallthru
      _
    // Predicated region
    $region14: #{tpu_custom_call.1} parent=1 // pred_check
      _
    $region15: #{tpu_custom_call.1} parent=1 // pred_check_branch
      %42 = sbr.rel (0) target = $region17
    $region16: #{tpu_custom_call.1} parent=1 // pred_region
      %s44 = ssub.s32 1024, 1024
      %45 = vsyncadd [#allocation6], %s44
      %s46 = sshll.u32 [#allocation7], 4
      %s47 = int_to_ptr.vmem [resolvable:$true] %s46
      %52 = dma.hbm_to_vmem [thread:$0]  %s3, 1024, %s47, [#allocation6], 64, 64, 4
    $region17: #{tpu_custom_call.1} parent=1 // pred_fallthru
      _
    // Predicated region
    $region18: #{tpu_custom_call.1} parent=1 // pred_check
      _
    $region19: #{tpu_custom_call.1} parent=1 // pred_check_branch
      %54 = sbr.rel (0) target = $region21
    $region20: #{tpu_custom_call.1} parent=1 // pred_region
      _
    $region21: #{tpu_custom_call.1} parent=1 // pred_fallthru
      _
    // Predicated region
    $region22: #{tpu_custom_call.1} parent=1 // pred_check
      _
    $region23: #{tpu_custom_call.1} parent=1 // pred_check_branch
      %56 = sbr.rel (0) target = $region25
    $region24: #{tpu_custom_call.1} parent=1 // pred_region
      %s58 = ssub.s32 1024, 1024
      %59 = vsyncadd [#allocation9], %s58
      %s60 = sshll.u32 [#allocation8], 4
      %s61 = int_to_ptr.vmem [resolvable:$true] %s60
      %66 = dma.hbm_to_vmem [thread:$0]  %s5, 1024, %s61, [#allocation9], 64, 64, 4
    $region25: #{tpu_custom_call.1} parent=1 // pred_fallthru
      _
    // Predicated region
    $region26: #{tpu_custom_call.1} parent=1 // pred_check
      _
    $region27: #{tpu_custom_call.1} parent=1 // pred_check_branch
      %68 = sbr.rel (0) target = $region29
    $region28: #{tpu_custom_call.1} parent=1 // pred_region
      %69 = dma.done [#allocation3], 256
    $region29: #{tpu_custom_call.1} parent=1 // pred_fallthru
      _
    // Predicated region
    $region30: #{tpu_custom_call.1} parent=1 // pred_check
      _
    $region31: #{tpu_custom_call.1} parent=1 // pred_check_branch
      %71 = sbr.rel (0) target = $region33
    $region32: #{tpu_custom_call.1} parent=1 // pred_region
      %72 = dma.done [#allocation6], 512
    $region33: #{tpu_custom_call.1} parent=1 // pred_fallthru
      _
    // Predicated region
    $region34: #{tpu_custom_call.1} parent=1 // pred_check
      _
    $region35: #{tpu_custom_call.1} parent=1 // pred_check_branch
      %74 = sbr.rel (0) target = $region37
    $region36: #{tpu_custom_call.1} parent=1 // pred_region
      %75 = dma.done [#allocation6], 1024
    $region37: #{tpu_custom_call.1} parent=1 // pred_fallthru
      _
    // Predicated region
    $region38: #{tpu_custom_call.1} parent=1 // pred_check
      _
    $region39: #{tpu_custom_call.1} parent=1 // pred_check_branch
      %77 = sbr.rel (0) target = $region41
    $region40: #{tpu_custom_call.1} parent=1 // pred_region
      %78 = dma.done [#allocation9], 1024
    $region41: #{tpu_custom_call.1} parent=1 // pred_fallthru
      _
    %v80 = vld [vmem:[#allocation2] sm:$0xff]
    %v81 = vld [vmem:[#allocation2 + $0x8] sm:$0xff]
    %v82 = vpack.c.bf16 %v81, %v80
    %v83 = vld [vmem:[#allocation5] sm:$0xf]
    %v84 = vld [vmem:[#allocation5 + $0x4] sm:$0xf]
    %v85 = vld [vmem:[#allocation5 + $0x8] sm:$0xf]
    %v86 = vld [vmem:[#allocation5 + $0xc] sm:$0xf]
    %v87 = vld [vmem:[#allocation5 + $0x10] sm:$0xf]
    %v88 = vld [vmem:[#allocation5 + $0x14] sm:$0xf]
    %v89 = vld [vmem:[#allocation5 + $0x18] sm:$0xf]
    %v90 = vld [vmem:[#allocation5 + $0x1c] sm:$0xf]
    %v91 = vld [vmem:[%s2] sm:$0x1]
    %v93 = vlaneseq
    %v94 = vshrl.u32 %v93, 7
    %v95 = vsub.s32 0, %v94
    %v96 = vrot.slane %v91, %v95
    %v106 = vunpack.c.l.b16 %v83
    %v107 = vunpack.c.l.b16 %v84
    %v108 = vunpack.c.l.b16 %v85
    %v109 = vunpack.c.l.b16 %v86
    %v110 = vunpack.c.l.b16 %v87
    %v111 = vunpack.c.l.b16 %v88
    %v112 = vunpack.c.l.b16 %v89
    %v113 = vunpack.c.l.b16 %v90
    %v114 = vpack.c.b16 %v107, %v106
    %v115 = vpack.c.b16 %v109, %v108
    %v116 = vpack.c.b16 %v111, %v110
    %v117 = vpack.c.b16 %v113, %v112
    %vm122 = vcmask 523264
    %v124 = vsel %vm122, %v82, 0
    %126 = vmatprep.subr.bf16.mxu0 0
    %127 = vmatpush1.bf16.msra.mxu0 0
    %128 = vmatprep.subr.bf16.mxu0 0
    %129 = vmatpush1.bf16.msra.mxu0 0
    %130 = vmatprep.subr.bf16.mxu0 0
    %131 = vmatpush1.bf16.msra.mxu0 0
    %132 = vmatprep.subr.bf16.mxu0 0
    %133 = vmatpush1.bf16.msra.mxu0 0
    %134 = vmatprep.subr.bf16.mxu0 0
    %135 = vmatpush1.bf16.msra.mxu0 %v117
    %136 = vmatprep.subr.bf16.mxu0 0
    %137 = vmatpush1.bf16.msra.mxu0 %v116
    %138 = vmatprep.subr.bf16.mxu0 0
    %139 = vmatpush1.bf16.msra.mxu0 %v115
    %140 = vmatprep.subr.bf16.mxu0 0
    %141 = vmatpush1.bf16.msra.mxu0 %v114
    %142 = vmatprep.subr.bf16.mxu0 0
    %143 = vmatpush2.bf16.msra.mxu0 0
    %144 = vmatprep.subr.bf16.mxu0 0
    %145 = vmatpush2.bf16.msra.mxu0 0
    %146 = vmatprep.subr.bf16.mxu0 0
    %147 = vmatpush2.bf16.msra.mxu0 0
    %148 = vmatprep.subr.bf16.mxu0 0
    %149 = vmatpush2.bf16.msra.mxu0 0
    %150 = vmatprep.subr.bf16.mxu0 0
    %151 = vmatpush2.bf16.msra.mxu0 0
    %152 = vmatprep.subr.bf16.mxu0 0
    %153 = vmatpush2.bf16.msra.mxu0 0
    %154 = vmatprep.subr.bf16.mxu0 0
    %155 = vmatpush2.bf16.msra.mxu0 0
    %156 = vmatprep.subr.bf16.mxu0 0
    %157 = vmatpush2.bf16.msra.mxu0 0
    %158 = vmatprep.mubr.bf16.mxu0 0
    %159 = vmatmul.mubr.bf16.gmra.mxu0 %v124
    %v160 = vpop.f32.mrf.mxu0
    %v161 = vadd.f32 %v96, %v160
    %v162 = vpop.f32.mrf.mxu0
    %v163 = vpop.f32.mrf.mxu0
    %v164 = vadd.f32 %v96, %v163
    %v165 = vpop.f32.mrf.mxu0
    %166 = vdwg.mxu0
    %v167 = vmax.f32 %v161, 0.0
    %v168 = vmax.f32 %v164, 0.0
    %v169 = vpack.c.bf16 %v168, %v167
    %v170 = vld [vmem:[#allocation7] sm:$0xf]
    %v171 = vld [vmem:[#allocation7 + $0x4] sm:$0xf]
    %v172 = vld [vmem:[#allocation7 + $0x8] sm:$0xf]
    %v173 = vld [vmem:[#allocation7 + $0xc] sm:$0xf]
    %v174 = vld [vmem:[#allocation7 + $0x10] sm:$0xf]
    %v175 = vld [vmem:[#allocation7 + $0x14] sm:$0xf]
    %v176 = vld [vmem:[#allocation7 + $0x18] sm:$0xf]
    %v177 = vld [vmem:[#allocation7 + $0x1c] sm:$0xf]
    %v178 = vld [vmem:[#allocation7 + $0x20] sm:$0xf]
    %v179 = vld [vmem:[#allocation7 + $0x24] sm:$0xf]
    %v180 = vld [vmem:[#allocation7 + $0x28] sm:$0xf]
    %v181 = vld [vmem:[#allocation7 + $0x2c] sm:$0xf]
    %v182 = vld [vmem:[#allocation7 + $0x30] sm:$0xf]
    %v183 = vld [vmem:[#allocation7 + $0x34] sm:$0xf]
    %v184 = vld [vmem:[#allocation7 + $0x38] sm:$0xf]
    %v185 = vld [vmem:[#allocation7 + $0x3c] sm:$0xf]
    %v186 = vld [vmem:[%s4] sm:$0x1]
    %v188 = vlaneseq
    %v189 = vshrl.u32 %v188, 7
    %v190 = vsub.s32 0, %v189
    %v191 = vrot.slane %v186, %v190
    %v209 = vunpack.c.l.b16 %v170
    %v210 = vunpack.c.l.b16 %v171
    %v211 = vunpack.c.l.b16 %v172
    %v212 = vunpack.c.l.b16 %v173
    %v213 = vunpack.c.l.b16 %v174
    %v214 = vunpack.c.l.b16 %v175
    %v215 = vunpack.c.l.b16 %v176
    %v216 = vunpack.c.l.b16 %v177
    %v217 = vunpack.c.l.b16 %v178
    %v218 = vunpack.c.l.b16 %v179
    %v219 = vunpack.c.l.b16 %v180
    %v220 = vunpack.c.l.b16 %v181
    %v221 = vunpack.c.l.b16 %v182
    %v222 = vunpack.c.l.b16 %v183
    %v223 = vunpack.c.l.b16 %v184
    %v224 = vunpack.c.l.b16 %v185
    %v225 = vpack.c.b16 %v210, %v209
    %v226 = vpack.c.b16 %v212, %v211
    %v227 = vpack.c.b16 %v214, %v213
    %v228 = vpack.c.b16 %v216, %v215
    %v229 = vpack.c.b16 %v218, %v217
    %v230 = vpack.c.b16 %v220, %v219
    %v231 = vpack.c.b16 %v222, %v221
    %v232 = vpack.c.b16 %v224, %v223
    %241 = vmatprep.subr.bf16.mxu0 0
    %242 = vmatpush1.bf16.msra.mxu0 %v232
    %243 = vmatprep.subr.bf16.mxu0 0
    %244 = vmatpush1.bf16.msra.mxu0 %v231
    %245 = vmatprep.subr.bf16.mxu0 0
    %246 = vmatpush1.bf16.msra.mxu0 %v230
    %247 = vmatprep.subr.bf16.mxu0 0
    %248 = vmatpush1.bf16.msra.mxu0 %v229
    %249 = vmatprep.subr.bf16.mxu0 0
    %250 = vmatpush1.bf16.msra.mxu0 %v228
    %251 = vmatprep.subr.bf16.mxu0 0
    %252 = vmatpush1.bf16.msra.mxu0 %v227
    %253 = vmatprep.subr.bf16.mxu0 0
    %254 = vmatpush1.bf16.msra.mxu0 %v226
    %255 = vmatprep.subr.bf16.mxu0 0
    %256 = vmatpush1.bf16.msra.mxu0 %v225
    %257 = vmatprep.subr.bf16.mxu0 0
    %258 = vmatpush2.bf16.msra.mxu0 0
    %259 = vmatprep.subr.bf16.mxu0 0
    %260 = vmatpush2.bf16.msra.mxu0 0
    %261 = vmatprep.subr.bf16.mxu0 0
    %262 = vmatpush2.bf16.msra.mxu0 0
    %263 = vmatprep.subr.bf16.mxu0 0
    %264 = vmatpush2.bf16.msra.mxu0 0
    %265 = vmatprep.subr.bf16.mxu0 0
    %266 = vmatpush2.bf16.msra.mxu0 0
    %267 = vmatprep.subr.bf16.mxu0 0
    %268 = vmatpush2.bf16.msra.mxu0 0
    %269 = vmatprep.subr.bf16.mxu0 0
    %270 = vmatpush2.bf16.msra.mxu0 0
    %271 = vmatprep.subr.bf16.mxu0 0
    %272 = vmatpush2.bf16.msra.mxu0 0
    %273 = vmatprep.mubr.bf16.mxu0 0
    %274 = vmatmul.mubr.bf16.gmra.mxu0 %v169
    %v275 = vpop.f32.mrf.mxu0
    %v276 = vadd.f32 %v191, %v275
    %v277 = vpop.f32.mrf.mxu0
    %v278 = vpop.f32.mrf.mxu0
    %v279 = vadd.f32 %v191, %v278
    %v280 = vpop.f32.mrf.mxu0
    %281 = vdwg.mxu0
    %v282 = vmax.f32 %v276, 0.0
    %v283 = vmax.f32 %v279, 0.0
    %v284 = vpack.c.bf16 %v283, %v282
    %v285 = vld [vmem:[#allocation8] sm:$0xf]
    %v286 = vld [vmem:[#allocation8 + $0x4] sm:$0xf]
    %v287 = vld [vmem:[#allocation8 + $0x8] sm:$0xf]
    %v288 = vld [vmem:[#allocation8 + $0xc] sm:$0xf]
    %v289 = vld [vmem:[#allocation8 + $0x10] sm:$0xf]
    %v290 = vld [vmem:[#allocation8 + $0x14] sm:$0xf]
    %v291 = vld [vmem:[#allocation8 + $0x18] sm:$0xf]
    %v292 = vld [vmem:[#allocation8 + $0x1c] sm:$0xf]
    %v293 = vld [vmem:[#allocation8 + $0x20] sm:$0xf]
    %v294 = vld [vmem:[#allocation8 + $0x24] sm:$0xf]
    %v295 = vld [vmem:[#allocation8 + $0x28] sm:$0xf]
    %v296 = vld [vmem:[#allocation8 + $0x2c] sm:$0xf]
    %v297 = vld [vmem:[#allocation8 + $0x30] sm:$0xf]
    %v298 = vld [vmem:[#allocation8 + $0x34] sm:$0xf]
    %v299 = vld [vmem:[#allocation8 + $0x38] sm:$0xf]
    %v300 = vld [vmem:[#allocation8 + $0x3c] sm:$0xf]
    %v317 = vunpack.c.l.b16 %v285
    %v318 = vunpack.c.l.b16 %v286
    %v319 = vunpack.c.l.b16 %v287
    %v320 = vunpack.c.l.b16 %v288
    %v321 = vunpack.c.l.b16 %v289
    %v322 = vunpack.c.l.b16 %v290
    %v323 = vunpack.c.l.b16 %v291
    %v324 = vunpack.c.l.b16 %v292
    %v325 = vunpack.c.l.b16 %v293
    %v326 = vunpack.c.l.b16 %v294
    %v327 = vunpack.c.l.b16 %v295
    %v328 = vunpack.c.l.b16 %v296
    %v329 = vunpack.c.l.b16 %v297
    %v330 = vunpack.c.l.b16 %v298
    %v331 = vunpack.c.l.b16 %v299
    %v332 = vunpack.c.l.b16 %v300
    %v333 = vpack.c.b16 %v318, %v317
    %v334 = vpack.c.b16 %v320, %v319
    %v335 = vpack.c.b16 %v322, %v321
    %v336 = vpack.c.b16 %v324, %v323
    %v337 = vpack.c.b16 %v326, %v325
    %v338 = vpack.c.b16 %v328, %v327
    %v339 = vpack.c.b16 %v330, %v329
    %v340 = vpack.c.b16 %v332, %v331
    %349 = vmatprep.subr.bf16.mxu0 0
    %350 = vmatpush1.bf16.msra.mxu0 %v340
    %351 = vmatprep.subr.bf16.mxu0 0
    %352 = vmatpush1.bf16.msra.mxu0 %v339
    %353 = vmatprep.subr.bf16.mxu0 0
    %354 = vmatpush1.bf16.msra.mxu0 %v338
    %355 = vmatprep.subr.bf16.mxu0 0
    %356 = vmatpush1.bf16.msra.mxu0 %v337
    %357 = vmatprep.subr.bf16.mxu0 0
    %358 = vmatpush1.bf16.msra.mxu0 %v336
    %359 = vmatprep.subr.bf16.mxu0 0
    %360 = vmatpush1.bf16.msra.mxu0 %v335
    %361 = vmatprep.subr.bf16.mxu0 0
    %362 = vmatpush1.bf16.msra.mxu0 %v334
    %363 = vmatprep.subr.bf16.mxu0 0
    %364 = vmatpush1.bf16.msra.mxu0 %v333
    %365 = vmatprep.subr.bf16.mxu0 0
    %366 = vmatpush2.bf16.msra.mxu0 0
    %367 = vmatprep.subr.bf16.mxu0 0
    %368 = vmatpush2.bf16.msra.mxu0 0
    %369 = vmatprep.subr.bf16.mxu0 0
    %370 = vmatpush2.bf16.msra.mxu0 0
    %371 = vmatprep.subr.bf16.mxu0 0
    %372 = vmatpush2.bf16.msra.mxu0 0
    %373 = vmatprep.subr.bf16.mxu0 0
    %374 = vmatpush2.bf16.msra.mxu0 0
    %375 = vmatprep.subr.bf16.mxu0 0
    %376 = vmatpush2.bf16.msra.mxu0 0
    %377 = vmatprep.subr.bf16.mxu0 0
    %378 = vmatpush2.bf16.msra.mxu0 0
    %379 = vmatprep.subr.bf16.mxu0 0
    %380 = vmatpush2.bf16.msra.mxu0 0
    %381 = vmatprep.mubr.bf16.mxu0 0
    %382 = vmatmul.mubr.bf16.gmra.mxu0 %v284
    %v383 = vpop.f32.mrf.mxu0
    %v384 = vadd.f32 0.0, %v383
    %v385 = vpop.f32.mrf.mxu0
    %v386 = vpop.f32.mrf.mxu0
    %v387 = vadd.f32 0.0, %v386
    %v388 = vpop.f32.mrf.mxu0
    %389 = vdwg.mxu0
    %390 = vst [vmem:[#allocation10] sm:$0xff] %v384
    %391 = vst [vmem:[#allocation10 + $0x8] sm:$0xff] %v387
    // Predicated region
    $region42: #{tpu_custom_call.1} parent=1 // pred_check
      _
    $region43: #{tpu_custom_call.1} parent=1 // pred_check_branch
      %393 = sbr.rel (0) target = $region45
    $region44: #{tpu_custom_call.1} parent=1 // pred_region
      %s395 = ssub.s32 256, 256
      %396 = vsyncadd [#allocation4], %s395
      %s397 = sshll.u32 [#allocation10], 4
      %s398 = int_to_ptr.vmem [resolvable:$true] %s397
      %403 = dma.vmem_to_hbm [thread:$0]  %s398, 256, %s6, [#allocation4], 128, 128, 8
    $region45: #{tpu_custom_call.1} parent=1 // pred_fallthru
      _
    // Predicated region
    $region46: #{tpu_custom_call.1} parent=1 // pred_check
      _
    $region47: #{tpu_custom_call.1} parent=1 // pred_check_branch
      %405 = sbr.rel (0) target = $region49
    $region48: #{tpu_custom_call.1} parent=1 // pred_region
      %406 = dma.done [#allocation4], 256
    $region49: #{tpu_custom_call.1} parent=1 // pred_fallthru
      _
    %407 = vsyncpa [#allocation3], 1
    %408 = vsyncpa [#allocation6], 1
    %409 = vsyncpa [#allocation9], 1
    %410 = vsyncpa [#allocation4], 1

</llo_original>
